<compile_context>
chip_gen: v6e
topology: v6e:2x2x1
jax: 0.10.0
libtpu: 0.0.40
codegen_flags: <defaults>
</compile_context>

<pallas_src>
import jax
import jax.numpy as jnp
from jax.experimental import pallas as pl
from jax.experimental.pallas import tpu as pltpu

N_OUT = 32  # true encoder output width (nn.Linear(obs_dim, 32))


def _encoder_kernel(x_ref, w_ref, b_ref, o_ref):
    # x_ref: (TB, obs_dim)  w_ref: (obs_dim, 32)  b_ref: (1, 32)  o_ref: (TB, 32)
    acc = jnp.dot(x_ref[...], w_ref[...], preferred_element_type=jnp.float32)
    o_ref[...] = jnp.tanh(acc + b_ref[...].astype(jnp.float32)).astype(o_ref.dtype)


def _round_up(x, m):
    return ((x + m - 1) // m) * m


def _choose_batch_tile(B, obs_dim, itemsize):
    """Pick the batch tile TB (trace-time Python; B is static under jit)."""
    # VMEM budget for the double-buffered streaming blocks (obs in + out):
    # 2 buffers * TB * (obs_dim + N_OUT) * itemsize  <=  ~4 MiB, cap at 4096.
    budget_bytes = 4 << 20
    per_row = 2 * (obs_dim + N_OUT) * itemsize
    cap = max(32, min(4096, (budget_bytes // per_row) // 32 * 32))
    if B <= cap:
        if B >= 1024:
            # Split into >=2 grid steps so the "parallel" batch axis shards
            # across both TensorCores on v7x megacore.
            return _round_up(pl.cdiv(B, 2), 32)
        # Single block equal to the full batch dim (legal for any B).
        return B
    return cap


@jax.jit
def single_input_encoder(obs, w_t, b):
    """Forward pass of SingleInputEncoder: tanh(obs @ w_t + b).

    obs: (B, obs_dim) activations.
    w_t: (obs_dim, 32) — torch nn.Linear.weight (32, obs_dim) transposed ONCE
         at parameter-conversion time, not per call.
    b:   (32,) or (1, 32) bias.
    Returns (B, 32).
    """
    B, obs_dim = obs.shape
    out_dtype = obs.dtype
    itemsize = jnp.dtype(out_dtype).itemsize

    b2 = b.reshape(1, N_OUT)  # metadata-only; no HBM copy

    TB = _choose_batch_tile(B, obs_dim, itemsize)
    grid = (pl.cdiv(B, TB),)  # ragged last block handled (masked) by Pallas

    cost = pl.CostEstimate(
        flops=2 * B * obs_dim * N_OUT,
        transcendentals=B * N_OUT,
        bytes_accessed=(B * obs_dim              # obs streamed in
                        + obs_dim * N_OUT + N_OUT  # resident weight + bias
                        + B * N_OUT) * itemsize,   # output streamed out
    )

    # TODO(synk): if obs_dim ever reaches the tens of thousands, add a K-tiled
    # ("arbitrary") grid axis with an f32 VMEM accumulator instead of keeping
    # the full (obs_dim, 32) weight resident (v7x VMEM is 64 MiB).
    # TODO(synk): when fused into the full SAC trunk, keep the (TB, 32)
    # activation in VMEM scratch and matmul the next layer's weight in the same
    # grid step instead of round-tripping it through HBM.
    out = pl.pallas_call(
        _encoder_kernel,
        out_shape=jax.ShapeDtypeStruct((B, N_OUT), out_dtype),
        grid_spec=pltpu.PrefetchScalarGridSpec(
            num_scalar_prefetch=0,
            grid=grid,
            in_specs=[
                # obs rows stream per grid step
                pl.BlockSpec((TB, obs_dim), lambda i: (i, 0)),
                # weight & bias: constant block index -> stay resident in VMEM
                pl.BlockSpec((obs_dim, N_OUT), lambda i: (0, 0)),
                pl.BlockSpec((1, N_OUT), lambda i: (0, 0)),
            ],
            out_specs=pl.BlockSpec((TB, N_OUT), lambda i: (i, 0)),
        ),
        compiler_params=pltpu.CompilerParams(
            dimension_semantics=("parallel",),
        ),
        cost_estimate=cost,
    )(obs, w_t, b2)

    return out


if __name__ == "__main__":
    key = jax.random.PRNGKey(0)
    k1, k2, k3 = jax.random.split(key, 3)

    batch, obs_dim = 2, 16
    obs = jax.random.normal(k1, (batch, obs_dim), dtype=jnp.float32)
    # torch stores Linear.weight as (32, obs_dim); we store its transpose once.
    w_t = 0.1 * jax.random.normal(k2, (obs_dim, N_OUT), dtype=jnp.float32)
    b = 0.1 * jax.random.normal(k3, (N_OUT,), dtype=jnp.float32)

    out = jax.block_until_ready(single_input_encoder(obs, w_t, b))

    ref = jnp.tanh(obs @ w_t + b)
    assert out.shape == (batch, N_OUT), out.shape
    assert jnp.allclose(out, ref, atol=1e-5, rtol=1e-5), float(
        jnp.max(jnp.abs(out - ref))
    )
    print("KERNEL_OK")
</pallas_src>

<mosaic_0001>
module attributes {stable_mosaic.version = 11 : i64} {
  func.func @_encoder_kernel(%arg0: i32, %arg1: memref<2x16xf32, #tpu.memory_space<vmem>>, %arg2: memref<16x32xf32, #tpu.memory_space<vmem>>, %arg3: memref<1x32xf32, #tpu.memory_space<vmem>>, %arg4: memref<2x32xf32, #tpu.memory_space<vmem>>) attributes {dimension_semantics = [#tpu.dimension_semantics<parallel>], iteration_bounds = array<i64: 1>, scalar_prefetch = 0 : i64, scratch_operands = 0 : i64, tpu.core_type = #tpu.core_type<tc>, window_params = [{transform_indices = @transform_0, window_bounds = array<i64: 2, 16>}, {pipeline_mode = #tpu.pipeline_mode<synchronous>, transform_indices = @transform_1, window_bounds = array<i64: 16, 32>}, {pipeline_mode = #tpu.pipeline_mode<synchronous>, transform_indices = @transform_2, window_bounds = array<i64: 1, 32>}, {transform_indices = @transform_3, window_bounds = array<i64: 2, 32>}]} {
    %c0 = arith.constant 0 : index
    %c0_0 = arith.constant 0 : index
    %0 = vector.load %arg1[%c0, %c0_0] : memref<2x16xf32, #tpu.memory_space<vmem>>, vector<2x16xf32>
    %c0_1 = arith.constant 0 : index
    %c0_2 = arith.constant 0 : index
    %1 = vector.load %arg2[%c0_1, %c0_2] : memref<16x32xf32, #tpu.memory_space<vmem>>, vector<16x32xf32>
    %cst = arith.constant dense<0.000000e+00> : vector<2x32xf32>
    %2 = tpu.matmul %0, %1, %cst {dimension_numbers = #tpu.dot_dimension_numbers<[1], [0], [0], [1], [0, 0, 1, 1], [], []>} : vector<2x16xf32>, vector<16x32xf32>, vector<2x32xf32> -> vector<2x32xf32>
    %c0_3 = arith.constant 0 : index
    %c0_4 = arith.constant 0 : index
    %3 = vector.load %arg3[%c0_3, %c0_4] : memref<1x32xf32, #tpu.memory_space<vmem>>, vector<1x32xf32>
    %4 = vector.broadcast %3 : vector<1x32xf32> to vector<2x32xf32>
    %5 = arith.addf %2, %4 : vector<2x32xf32>
    %6 = math.tanh %5 : vector<2x32xf32>
    %c0_5 = arith.constant 0 : index
    %c0_6 = arith.constant 0 : index
    %7 = vector.load %arg4[%c0_5, %c0_6] : memref<2x32xf32, #tpu.memory_space<vmem>>, vector<2x32xf32>
    tpu.vector_store %arg4[%c0_5, %c0_6], %6 {strides = array<i32>} : memref<2x32xf32, #tpu.memory_space<vmem>>, vector<2x32xf32>,
    return
  }
  func.func @transform_0(%arg0: i32) -> (i32, i32) {
    %c0_i32 = arith.constant 0 : i32
    %c0_i32_0 = arith.constant 0 : i32
    return %arg0, %c0_i32 : i32, i32
  }
  func.func @transform_1(%arg0: i32) -> (i32, i32) {
    %c0_i32 = arith.constant 0 : i32
    %c0_i32_0 = arith.constant 0 : i32
    %c0_i32_1 = arith.constant 0 : i32
    return %c0_i32, %c0_i32_0 : i32, i32
  }
  func.func @transform_2(%arg0: i32) -> (i32, i32) {
    %c0_i32 = arith.constant 0 : i32
    %c0_i32_0 = arith.constant 0 : i32
    %c0_i32_1 = arith.constant 0 : i32
    return %c0_i32, %c0_i32_0 : i32, i32
  }
  func.func @transform_3(%arg0: i32) -> (i32, i32) {
    %c0_i32 = arith.constant 0 : i32
    %c0_i32_0 = arith.constant 0 : i32
    return %arg0, %c0_i32 : i32, i32
  }
}

</mosaic_0001>

<llo_original>
// kernel: single_input_encoder.1
$region0: #{single_input_encoder.1}
  #allocation0 [shape = 'u32[]', space=smem, size = 0x4, offset = 0x4, fixed_abs, tag = 'smem constant byte address 0x4 - core index']
  #allocation1 [shape = 'u32[144,128]{1,0:T(1,128)}', space=vmem, size = 0x12000, scoped, tag = 'internal scratch']
  %s0 = inlined_call_operand.hbm [shape: f32[2,16], index: 0, kind: input, shape index: {}]
  %s1 = inlined_call_operand.hbm [shape: f32[16,32], index: 1, kind: input, shape index: {}]
  %s2 = inlined_call_operand.vmem [shape: f32[1,32], index: 2, kind: input, shape index: {}]
  %s3 = inlined_call_operand.hbm [shape: f32[2,32], index: 3, kind: output, shape index: {}]
  %s4 = sld [smem:[#allocation0]]
  $region30: #{single_input_encoder.1} parent=0
    _
  %s6 = ssub.s32 1, %s4
  %s7 = scalar_select 0, %s6, %s4
  $region1: #{single_input_encoder.1} parent=0
    #allocation2 [shape = 'u8[1024]{0}', space=vmem, size = 0x400, scoped, tag = 'input window, operand 0, single buffered']
    #allocation3 [shape = 's32[1]{0}', space=sflag, size = 0x4, scoped, tag = 'scoped memory for single_input_encoder.1']
    #allocation4 [shape = 's32[1]{0}', space=sflag, size = 0x4, scoped, tag = 'scoped memory for single_input_encoder.1']
    #allocation5 [shape = 'u8[8192]{0}', space=vmem, size = 0x2000, scoped, tag = 'input window, operand 1, single buffered']
    #allocation6 [shape = 's32[1]{0}', space=sflag, size = 0x4, scoped, tag = 'scoped memory for single_input_encoder.1']
    #allocation7 [shape = 'u8[1024]{0}', space=vmem, size = 0x400, scoped, tag = 'output window, operand 0, single buffered']
    %8 = vsyncpa [#allocation3], 0
    %9 = vsyncpa [#allocation6], 0
    %10 = vsyncpa [#allocation4], 0
    // Predicated region
    $region2: #{single_input_encoder.1} parent=1 // pred_check
      _
    $region3: #{single_input_encoder.1} parent=1 // pred_check_branch
      %12 = sbr.rel (0) target = $region5
    $region4: #{single_input_encoder.1} parent=1 // pred_region
      %s14 = ssub.s32 32, 32
      %15 = vsyncadd [#allocation3], %s14
      %s17 = sshll.u32 [#allocation2], 4
      %s18 = int_to_ptr.vmem [resolvable:$true] %s17
      %20 = dma.hbm_to_vmem [thread:$0]  %s0, 32, %s18, [#allocation3]
    $region5: #{single_input_encoder.1} parent=1 // pred_fallthru
      _
    // Predicated region
    $region6: #{single_input_encoder.1} parent=1 // pred_check
      _
    $region7: #{single_input_encoder.1} parent=1 // pred_check_branch
      %22 = sbr.rel (0) target = $region9
    $region8: #{single_input_encoder.1} parent=1 // pred_region
      %s24 = ssub.s32 256, 256
      %25 = vsyncadd [#allocation6], %s24
      %s26 = sshll.u32 [#allocation5], 4
      %s27 = int_to_ptr.vmem [resolvable:$true] %s26
      %32 = dma.hbm_to_vmem [thread:$0]  %s1, 256, %s27, [#allocation6], 128, 128, 8
    $region9: #{single_input_encoder.1} parent=1 // pred_fallthru
      _
    // Predicated region
    $region10: #{single_input_encoder.1} parent=1 // pred_check
      _
    $region11: #{single_input_encoder.1} parent=1 // pred_check_branch
      %34 = sbr.rel (0) target = $region13
    $region12: #{single_input_encoder.1} parent=1 // pred_region
      _
    $region13: #{single_input_encoder.1} parent=1 // pred_fallthru
      _
    // Predicated region
    $region14: #{single_input_encoder.1} parent=1 // pred_check
      _
    $region15: #{single_input_encoder.1} parent=1 // pred_check_branch
      %36 = sbr.rel (0) target = $region17
    $region16: #{single_input_encoder.1} parent=1 // pred_region
      %37 = dma.done [#allocation3], 32
    $region17: #{single_input_encoder.1} parent=1 // pred_fallthru
      _
    // Predicated region
    $region18: #{single_input_encoder.1} parent=1 // pred_check
      _
    $region19: #{single_input_encoder.1} parent=1 // pred_check_branch
      %39 = sbr.rel (0) target = $region21
    $region20: #{single_input_encoder.1} parent=1 // pred_region
      %40 = dma.done [#allocation6], 256
    $region21: #{single_input_encoder.1} parent=1 // pred_fallthru
      _
    %v41 = vld [vmem:[#allocation2] sm:$0x3]
    %v42 = vld [vmem:[#allocation5] sm:$0xff]
    %v43 = vld [vmem:[#allocation5 + $0x8] sm:$0xff]
    %v44 = vld [vmem:[%s2] sm:$0x1]
    %v46 = vlaneseq
    %v47 = vshrl.u32 %v46, 7
    %v48 = vsub.s32 0, %v47
    %v49 = vrot.slane %v44, %v48
    %vm51 = vcmask 130048
    %v53 = vsel %vm51, %v41, 0
    %55 = vmatprep.subr.mxu0 0.0
    %56 = vmatpush1.msra.mxu0 0.0
    %57 = vmatprep.subr.mxu0 0.0
    %58 = vmatpush1.msra.mxu0 0.0
    %59 = vmatprep.subr.mxu0 0.0
    %60 = vmatpush1.msra.mxu0 0.0
    %61 = vmatprep.subr.mxu0 0.0
    %62 = vmatpush1.msra.mxu0 0.0
    %63 = vmatprep.subr.mxu0 0.0
    %64 = vmatpush1.msra.mxu0 0.0
    %65 = vmatprep.subr.mxu0 0.0
    %66 = vmatpush1.msra.mxu0 0.0
    %67 = vmatprep.subr.mxu0 0.0
    %68 = vmatpush1.msra.mxu0 0.0
    %69 = vmatprep.subr.mxu0 0.0
    %70 = vmatpush1.msra.mxu0 0.0
    %71 = vmatprep.subr.mxu0 0.0
    %72 = vmatpush1.msra.mxu0 0.0
    %73 = vmatprep.subr.mxu0 0.0
    %74 = vmatpush1.msra.mxu0 0.0
    %75 = vmatprep.subr.mxu0 0.0
    %76 = vmatpush1.msra.mxu0 0.0
    %77 = vmatprep.subr.mxu0 0.0
    %78 = vmatpush1.msra.mxu0 0.0
    %79 = vmatprep.subr.mxu0 0.0
    %80 = vmatpush1.msra.mxu0 0.0
    %81 = vmatprep.subr.mxu0 0.0
    %82 = vmatpush1.msra.mxu0 0.0
    %83 = vmatprep.subr.mxu0 0.0
    %84 = vmatpush1.msra.mxu0 %v43
    %85 = vmatprep.subr.mxu0 0.0
    %86 = vmatpush1.msra.mxu0 %v42
    %87 = vmatprep.subr.mxu0 0.0
    %88 = vmatpush2.msra.mxu0 0.0
    %89 = vmatprep.subr.mxu0 0.0
    %90 = vmatpush2.msra.mxu0 0.0
    %91 = vmatprep.subr.mxu0 0.0
    %92 = vmatpush2.msra.mxu0 0.0
    %93 = vmatprep.subr.mxu0 0.0
    %94 = vmatpush2.msra.mxu0 0.0
    %95 = vmatprep.subr.mxu0 0.0
    %96 = vmatpush2.msra.mxu0 0.0
    %97 = vmatprep.subr.mxu0 0.0
    %98 = vmatpush2.msra.mxu0 0.0
    %99 = vmatprep.subr.mxu0 0.0
    %100 = vmatpush2.msra.mxu0 0.0
    %101 = vmatprep.subr.mxu0 0.0
    %102 = vmatpush2.msra.mxu0 0.0
    %103 = vmatprep.subr.mxu0 0.0
    %104 = vmatpush2.msra.mxu0 0.0
    %105 = vmatprep.subr.mxu0 0.0
    %106 = vmatpush2.msra.mxu0 0.0
    %107 = vmatprep.subr.mxu0 0.0
    %108 = vmatpush2.msra.mxu0 0.0
    %109 = vmatprep.subr.mxu0 0.0
    %110 = vmatpush2.msra.mxu0 0.0
    %111 = vmatprep.subr.mxu0 0.0
    %112 = vmatpush2.msra.mxu0 0.0
    %113 = vmatprep.subr.mxu0 0.0
    %114 = vmatpush2.msra.mxu0 0.0
    %115 = vmatprep.subr.mxu0 0.0
    %116 = vmatpush2.msra.mxu0 0.0
    %117 = vmatprep.subr.mxu0 0.0
    %118 = vmatpush2.msra.mxu0 0.0
    %119 = vmatprep.mubr.f32.mxu0 0.0
    %120 = vmatmul.mubr.f32.gmra.mxu0 %v53
    %v121 = vpop.f32.mrf.mxu0
    %v122 = vadd.f32 %v49, %v121
    %v123 = vpop.f32.mrf.mxu0
    %124 = vdwg.mxu0
    %v125 = vtanh.pop %v122
    %vm126 = vcmask 254976
    %127 = vst.msk [vmem:[#allocation7] sm:$0x3] %vm126, %v125
    // Predicated region
    $region22: #{single_input_encoder.1} parent=1 // pred_check
      _
    $region23: #{single_input_encoder.1} parent=1 // pred_check_branch
      %129 = sbr.rel (0) target = $region25
    $region24: #{single_input_encoder.1} parent=1 // pred_region
      %s131 = ssub.s32 32, 32
      %132 = vsyncadd [#allocation4], %s131
      %s134 = sshll.u32 [#allocation7], 4
      %s135 = int_to_ptr.vmem [resolvable:$true] %s134
      %137 = dma.vmem_to_hbm [thread:$0]  %s135, 32, %s3, [#allocation4]
    $region25: #{single_input_encoder.1} parent=1 // pred_fallthru
      _
    // Predicated region
    $region26: #{single_input_encoder.1} parent=1 // pred_check
      _
    $region27: #{single_input_encoder.1} parent=1 // pred_check_branch
      %139 = sbr.rel (0) target = $region29
    $region28: #{single_input_encoder.1} parent=1 // pred_region
      %140 = dma.done [#allocation4], 32
    $region29: #{single_input_encoder.1} parent=1 // pred_fallthru
      _
    %141 = vsyncpa [#allocation3], 1
    %142 = vsyncpa [#allocation6], 1
    %143 = vsyncpa [#allocation4], 1

</llo_original>
